<compile_context>
chip_gen: v7x
topology: tpu7x:2x2x1
jax: 0.10.0
libtpu: 0.0.40
codegen_flags: <defaults>
</compile_context>

<pallas_src>
import functools
import math

import jax
import jax.numpy as jnp
from jax import lax
from jax.experimental import pallas as pl
from jax.experimental.pallas import tpu as pltpu


_NEG = float(jnp.finfo(jnp.float32).min)


def _make_infonce_kernel(n_valid, mask_pad_cols):
    """n_valid / mask_pad_cols are static Python values baked at trace time."""

    def kernel(zq_ref, zk_ref, pos_ref, out_ref, m_sc, l_sc):
        qi = pl.program_id(0)          # row-tile index   (parallel)
        ki = pl.program_id(1)          # col-tile index   (reduction, last axis)
        nk = pl.num_programs(1)
        tq = zq_ref.shape[0]
        tk = zk_ref.shape[0]

        @pl.when(ki == 0)
        def _init():
            m_sc[...] = jnp.full_like(m_sc, -jnp.inf)
            l_sc[...] = jnp.zeros_like(l_sc)

        # (tq, tk) tile of the (already temperature-scaled) similarity matrix,
        # computed as a value (no VMEM round-trip).  Contract the feature axis
        # of BOTH operands -> MXU without a transpose.
        s = lax.dot_general(
            zq_ref[...], zk_ref[...],
            dimension_numbers=(((1,), (1,)), ((), ())),
            preferred_element_type=jnp.float32,
        )

        # Mask the self-similarity diagonal (all-false on off-diagonal tiles)
        # and, if the batch was padded, the padded columns.
        r = qi * tq + lax.broadcasted_iota(jnp.int32, (tq, tk), 0)
        c = ki * tk + lax.broadcasted_iota(jnp.int32, (tq, tk), 1)
        mask = r == c
        if mask_pad_cols:
            mask = jnp.logical_or(mask, c >= n_valid)
        s = jnp.where(mask, _NEG, s)

        # Online (streaming) logsumexp across col tiles.
        m_prev = m_sc[...]
        m_new = jnp.maximum(m_prev, jnp.max(s, axis=-1, keepdims=True))
        alpha = jnp.exp(m_prev - m_new)
        l_sc[...] = alpha * l_sc[...] + jnp.sum(jnp.exp(s - m_new),
                                                axis=-1, keepdims=True)
        m_sc[...] = m_new

        @pl.when(ki == nk - 1)
        def _finalize():
            out_ref[...] = (m_sc[...] + jnp.log(l_sc[...])) - pos_ref[...]

    return kernel


def _round_up(x, m):
    return ((x + m - 1) // m) * m


def _vmem_estimate(tq, tk, c, itemsize):
    z_tiles = 2 * (tq + tk) * c * itemsize   # double-buffered (tq,C) + (tk,C)
    vec = 2 * 2 * tq * 4                     # pos + out (tq,1) f32, double-buffered
    scratch = 2 * tq * 4                     # m, l accumulators
    score = 2 * tq * tk * 4                  # score tile value + softmax temps
    return z_tiles + vec + scratch + score


def _default_tiles(n, c, itemsize, vmem_budget=48 * 1024 * 1024):
    """MXU/lane-friendly tiles: tk in {128,256}, tq up to 512, VMEM-bounded."""
    min_sub = 16 if itemsize == 2 else 8
    if n <= 128:
        t = _round_up(n, min_sub)
        return t, t
    tk = 256 if n >= 256 else 128
    tq = 512
    # Keep >= 2 row tiles so the "parallel" qi axis can shard across TensorCores.
    while tq > 128 and _round_up(n, tq) // tq < 2:
        tq //= 2
    # Shrink the row tile if the double-buffered working set would not fit VMEM.
    while tq > 128 and _vmem_estimate(tq, tk, c, itemsize) > vmem_budget:
        tq //= 2
    return tq, tk


def infonce_loss(image, text, temperature=0.07, *, block_q=None, block_k=None):
    """Pallas-backed InfoNCE loss. image, text: (B, C) arrays (f32 or bf16)."""
    B, C = image.shape
    assert text.shape == (B, C)
    N = 2 * B
    itemsize = jnp.dtype(image.dtype).itemsize
    min_sub = 16 if itemsize == 2 else 8

    tq_d, tk_d = _default_tiles(N, C, itemsize)
    tq = block_q if block_q is not None else tq_d
    tk = block_k if block_k is not None else tk_d
    assert tq % min_sub == 0 and tk % min_sub == 0, "tiles must respect min sublane"

    n_pad = _round_up(N, math.lcm(tq, tk))

    # Fold the temperature into the operands once: (z/sqrt(T)).(z/sqrt(T)) = z.z/T.
    inv_sqrt_t = float(temperature) ** -0.5
    z = jnp.concatenate([image, text], axis=0) * inv_sqrt_t           # (N, C)

    # Positive logit per row: image_i . text_i / T (identical for rows i and i+B).
    pos = jnp.sum(image.astype(jnp.float32) * text.astype(jnp.float32), axis=-1)
    pos = (jnp.concatenate([pos, pos]) / float(temperature))[:, None]  # (N, 1) f32

    if n_pad > N:
        z = jnp.pad(z, ((0, n_pad - N), (0, 0)))
        pos = jnp.pad(pos, ((0, n_pad - N), (0, 0)))

    grid = (n_pad // tq, n_pad // tk)
    vmem_limit = int(min(56 * 1024 * 1024,
                         max(32 * 1024 * 1024,
                             2 * _vmem_estimate(tq, tk, C, itemsize))))

    per_row = pl.pallas_call(
        _make_infonce_kernel(n_valid=N, mask_pad_cols=(n_pad > N)),
        out_shape=jax.ShapeDtypeStruct((n_pad, 1), jnp.float32),
        grid_spec=pltpu.PrefetchScalarGridSpec(
            num_scalar_prefetch=0,
            grid=grid,
            in_specs=[
                pl.BlockSpec((tq, C), lambda qi, ki: (qi, 0)),   # row tile of z
                pl.BlockSpec((tk, C), lambda qi, ki: (ki, 0)),   # col tile of z
                pl.BlockSpec((tq, 1), lambda qi, ki: (qi, 0)),   # positives (N,1)
            ],
            out_specs=pl.BlockSpec((tq, 1), lambda qi, ki: (qi, 0)),
            scratch_shapes=[
                pltpu.VMEM((tq, 1), jnp.float32),    # running max
                pltpu.VMEM((tq, 1), jnp.float32),    # running sum of exp
            ],
        ),
        compiler_params=pltpu.CompilerParams(
            dimension_semantics=("parallel", "arbitrary"),
            vmem_limit_bytes=vmem_limit,
        ),
    )(z, z, pos)

    # Drop padded rows; the tiny final mean happens outside the kernel.
    return jnp.mean(per_row[:N, 0])


def _infonce_ref(image, text, temperature=0.07):
    """Pure-JAX reference mirroring the PyTorch module."""
    B = image.shape[0]
    z = jnp.concatenate([image, text], axis=0).astype(jnp.float32)
    logits = jnp.einsum("nc,mc->nm", z, z,
                        precision=lax.Precision.HIGHEST) / temperature
    N = 2 * B
    idx = jnp.arange(N)
    pos = logits[idx, (idx + B) % N]
    masked = jnp.where(jnp.eye(N, dtype=bool), -jnp.inf, logits)
    lse = jax.scipy.special.logsumexp(masked, axis=-1)
    return jnp.mean(lse - pos)


if __name__ == "__main__":
    key = jax.random.PRNGKey(0)
    k1, k2, k3, k4 = jax.random.split(key, 4)

    # Case 1: explicit small tiles -> grid (4, 4): exercises multi-tile online
    # logsumexp accumulation and diagonal masking on diagonal tiles only.
    B, C = 16, 32
    image = jax.random.normal(k1, (B, C), dtype=jnp.float32)
    text = jax.random.normal(k2, (B, C), dtype=jnp.float32)
    loss = jax.block_until_ready(infonce_loss(image, text, block_q=8, block_k=8))
    ref = _infonce_ref(image, text)
    assert jnp.allclose(loss, ref, rtol=1e-4, atol=1e-3), (loss, ref)

    # Case 2: default tile selection with a non-divisible batch (N=26 padded to
    # 32): exercises padded-column masking + padded-row exclusion from the mean.
    B2, C2 = 13, 24
    image2 = jax.random.normal(k3, (B2, C2), dtype=jnp.float32)
    text2 = jax.random.normal(k4, (B2, C2), dtype=jnp.float32)
    loss2 = jax.block_until_ready(infonce_loss(image2, text2))
    ref2 = _infonce_ref(image2, text2)
    assert jnp.allclose(loss2, ref2, rtol=1e-4, atol=1e-3), (loss2, ref2)

    print("KERNEL_OK")
</pallas_src>

<mosaic_0001>
module attributes {stable_mosaic.version = 11 : i64} {
  func.func @kernel(%arg0: i32, %arg1: i32, %arg2: memref<8x32xf32, #tpu.memory_space<vmem>>, %arg3: memref<8x32xf32, #tpu.memory_space<vmem>>, %arg4: memref<8x1xf32, #tpu.memory_space<vmem>>, %arg5: memref<8x1xf32, #tpu.memory_space<vmem>>, %arg6: memref<8x1xf32, #tpu.memory_space<vmem>>, %arg7: memref<8x1xf32, #tpu.memory_space<vmem>>) attributes {dimension_semantics = [#tpu.dimension_semantics<parallel>, #tpu.dimension_semantics<arbitrary>], iteration_bounds = array<i64: 4, 4>, scalar_prefetch = 0 : i64, scratch_operands = 2 : i64, tpu.core_type = #tpu.core_type<tc>, window_params = [{transform_indices = @transform_0, window_bounds = array<i64: 8, 32>}, {transform_indices = @transform_1, window_bounds = array<i64: 8, 32>}, {transform_indices = @transform_2, window_bounds = array<i64: 8, 1>}, {transform_indices = @transform_3, window_bounds = array<i64: 8, 1>}]} {
    %c0_i32 = arith.constant 0 : i32
    %0 = arith.cmpi eq, %arg1, %c0_i32 : i32
    %1 = arith.extui %0 : i1 to i32
    %c0_i32_0 = arith.constant 0 : i32
    %2 = arith.cmpi ne, %1, %c0_i32_0 : i32
    scf.if %2 {
      %cst_17 = arith.constant 0xFF800000 : f32
      %36 = vector.broadcast %cst_17 : f32 to vector<8x1xf32>
      %c0_18 = arith.constant 0 : index
      %c0_19 = arith.constant 0 : index
      %37 = vector.load %arg6[%c0_18, %c0_19] : memref<8x1xf32, #tpu.memory_space<vmem>>, vector<8x1xf32>
      tpu.vector_store %arg6[%c0_18, %c0_19], %36 {strides = array<i32>} : memref<8x1xf32, #tpu.memory_space<vmem>>, vector<8x1xf32>,
      %cst_20 = arith.constant 0.000000e+00 : f32
      %38 = vector.broadcast %cst_20 : f32 to vector<8x1xf32>
      %c0_21 = arith.constant 0 : index
      %c0_22 = arith.constant 0 : index
      %39 = vector.load %arg7[%c0_21, %c0_22] : memref<8x1xf32, #tpu.memory_space<vmem>>, vector<8x1xf32>
      tpu.vector_store %arg7[%c0_21, %c0_22], %38 {strides = array<i32>} : memref<8x1xf32, #tpu.memory_space<vmem>>, vector<8x1xf32>,
    } else {
    }
    %c0 = arith.constant 0 : index
    %c0_1 = arith.constant 0 : index
    %3 = vector.load %arg2[%c0, %c0_1] : memref<8x32xf32, #tpu.memory_space<vmem>>, vector<8x32xf32>
    %c0_2 = arith.constant 0 : index
    %c0_3 = arith.constant 0 : index
    %4 = vector.load %arg3[%c0_2, %c0_3] : memref<8x32xf32, #tpu.memory_space<vmem>>, vector<8x32xf32>
    %cst = arith.constant dense<0.000000e+00> : vector<8x8xf32>
    %5 = tpu.matmul %3, %4, %cst {dimension_numbers = #tpu.dot_dimension_numbers<[1], [1], [0], [0], [0, 0, 1, 0], [], []>} : vector<8x32xf32>, vector<8x32xf32>, vector<8x8xf32> -> vector<8x8xf32>
    %c8_i32 = arith.constant 8 : i32
    %6 = arith.muli %arg0, %c8_i32 : i32
    %7 = tpu.iota {dimensions = array<i32: 0>} : vector<8x8xi32>
    %8 = vector.broadcast %6 : i32 to vector<8x8xi32>
    %9 = arith.addi %8, %7 : vector<8x8xi32>
    %c8_i32_4 = arith.constant 8 : i32
    %10 = arith.muli %arg1, %c8_i32_4 : i32
    %11 = tpu.iota {dimensions = array<i32: 1>} : vector<8x8xi32>
    %12 = vector.broadcast %10 : i32 to vector<8x8xi32>
    %13 = arith.addi %12, %11 : vector<8x8xi32>
    %14 = arith.cmpi eq, %9, %13 : vector<8x8xi32>
    %cst_5 = arith.constant -3.40282347E+38 : f32
    %15 = vector.broadcast %cst_5 : f32 to vector<8x8xf32>
    %16 = arith.select %14, %15, %5 : vector<8x8xi1>, vector<8x8xf32>
    %c0_6 = arith.constant 0 : index
    %c0_7 = arith.constant 0 : index
    %17 = vector.load %arg6[%c0_6, %c0_7] : memref<8x1xf32, #tpu.memory_space<vmem>>, vector<8x1xf32>
    %cst_8 = arith.constant dense<0xFF800000> : vector<8xf32>
    %18 = vector.multi_reduction <maximumf>, %16, %cst_8 [1] : vector<8x8xf32> to vector<8xf32>
    %19 = vector.shape_cast %18 : vector<8xf32> to vector<8x1xf32>
    %20 = arith.maximumf %17, %19 : vector<8x1xf32>
    %21 = arith.subf %17, %20 : vector<8x1xf32>
    %22 = math.exp %21 : vector<8x1xf32>
    %c0_9 = arith.constant 0 : index
    %c0_10 = arith.constant 0 : index
    %23 = vector.load %arg7[%c0_9, %c0_10] : memref<8x1xf32, #tpu.memory_space<vmem>>, vector<8x1xf32>
    %24 = arith.mulf %22, %23 : vector<8x1xf32>
    %25 = vector.broadcast %20 : vector<8x1xf32> to vector<8x8xf32>
    %26 = arith.subf %16, %25 : vector<8x8xf32>
    %27 = math.exp %26 : vector<8x8xf32>
    %cst_11 = arith.constant dense<0.000000e+00> : vector<8xf32>
    %28 = vector.multi_reduction <add>, %27, %cst_11 [1] : vector<8x8xf32> to vector<8xf32>
    %29 = vector.shape_cast %28 : vector<8xf32> to vector<8x1xf32>
    %30 = arith.addf %24, %29 : vector<8x1xf32>
    %c0_12 = arith.constant 0 : index
    %c0_13 = arith.constant 0 : index
    %31 = vector.load %arg7[%c0_12, %c0_13] : memref<8x1xf32, #tpu.memory_space<vmem>>, vector<8x1xf32>
    tpu.vector_store %arg7[%c0_12, %c0_13], %30 {strides = array<i32>} : memref<8x1xf32, #tpu.memory_space<vmem>>, vector<8x1xf32>,
    %c0_14 = arith.constant 0 : index
    %c0_15 = arith.constant 0 : index
    %32 = vector.load %arg6[%c0_14, %c0_15] : memref<8x1xf32, #tpu.memory_space<vmem>>, vector<8x1xf32>
    tpu.vector_store %arg6[%c0_14, %c0_15], %20 {strides = array<i32>} : memref<8x1xf32, #tpu.memory_space<vmem>>, vector<8x1xf32>,
    %c3_i32 = arith.constant 3 : i32
    %33 = arith.cmpi eq, %arg1, %c3_i32 : i32
    %34 = arith.extui %33 : i1 to i32
    %c0_i32_16 = arith.constant 0 : i32
    %35 = arith.cmpi ne, %34, %c0_i32_16 : i32
    scf.if %35 {
      %c0_17 = arith.constant 0 : index
      %c0_18 = arith.constant 0 : index
      %36 = vector.load %arg6[%c0_17, %c0_18] : memref<8x1xf32, #tpu.memory_space<vmem>>, vector<8x1xf32>
      %c0_19 = arith.constant 0 : index
      %c0_20 = arith.constant 0 : index
      %37 = vector.load %arg7[%c0_19, %c0_20] : memref<8x1xf32, #tpu.memory_space<vmem>>, vector<8x1xf32>
      %38 = math.log %37 : vector<8x1xf32>
      %39 = arith.addf %36, %38 : vector<8x1xf32>
      %c0_21 = arith.constant 0 : index
      %c0_22 = arith.constant 0 : index
      %40 = vector.load %arg4[%c0_21, %c0_22] : memref<8x1xf32, #tpu.memory_space<vmem>>, vector<8x1xf32>
      %41 = arith.subf %39, %40 : vector<8x1xf32>
      %c0_23 = arith.constant 0 : index
      %c0_24 = arith.constant 0 : index
      %42 = vector.load %arg5[%c0_23, %c0_24] : memref<8x1xf32, #tpu.memory_space<vmem>>, vector<8x1xf32>
      tpu.vector_store %arg5[%c0_23, %c0_24], %41 {strides = array<i32>} : memref<8x1xf32, #tpu.memory_space<vmem>>, vector<8x1xf32>,
    } else {
    }
    return
  }
  func.func @transform_0(%arg0: i32, %arg1: i32) -> (i32, i32) {
    %c0_i32 = arith.constant 0 : i32
    %c0_i32_0 = arith.constant 0 : i32
    return %arg0, %c0_i32 : i32, i32
  }
  func.func @transform_1(%arg0: i32, %arg1: i32) -> (i32, i32) {
    %c0_i32 = arith.constant 0 : i32
    %c0_i32_0 = arith.constant 0 : i32
    return %arg1, %c0_i32 : i32, i32
  }
  func.func @transform_2(%arg0: i32, %arg1: i32) -> (i32, i32) {
    %c0_i32 = arith.constant 0 : i32
    %c0_i32_0 = arith.constant 0 : i32
    return %arg0, %c0_i32 : i32, i32
  }
  func.func @transform_3(%arg0: i32, %arg1: i32) -> (i32, i32) {
    %c0_i32 = arith.constant 0 : i32
    %c0_i32_0 = arith.constant 0 : i32
    return %arg0, %c0_i32 : i32, i32
  }
}

</mosaic_0001>

<llo_original>
// kernel: tpu_custom_call.1
$region0: #{tpu_custom_call.1}
  #allocation0 [shape = 'u32[]', space=smem, size = 0x4, offset = 0x4, fixed_abs, tag = 'smem constant byte address 0x4 - core index']
  #allocation1 [shape = 'u32[144,128]{1,0:T(1,128)}', space=vmem, size = 0x12000, scoped, tag = 'internal scratch']
  #allocation2 [shape = 'f32[8,1]{1,0:T(8,128)}', space=vmem, size = 0x1000, scoped, tag = 'scratch operand']
  #allocation3 [shape = 'f32[8,1]{1,0:T(8,128)}', space=vmem, size = 0x1000, scoped, tag = 'scratch operand']
  %s0 = inlined_call_operand.vmem [shape: f32[32,32], index: 0, kind: input, shape index: {}]
  %s1 = inlined_call_operand.hbm [shape: f32[32,32], index: 1, kind: input, shape index: {}]
  %s2 = inlined_call_operand.vmem [shape: f32[32,1], index: 2, kind: input, shape index: {}]
  %s3 = inlined_call_operand.vmem [shape: f32[32,1], index: 3, kind: output, shape index: {}]
  %s4 = sld [smem:[#allocation0]]
  $region57: #{tpu_custom_call.1} parent=0
    _
  %s6 = ssub.s32 1, %s4
  %s7 = scalar_select 0, %s6, %s4
  $region1: #{tpu_custom_call.1} parent=0
    #allocation4 [shape = 'u8[8192]{0}', space=vmem, size = 0x2000, scoped, tag = 'input window, operand 1']
    #allocation5 [shape = 's32[2]{0}', space=sflag, size = 0x8, scoped, tag = 'scoped memory for tpu_custom_call.1']
    %8 = vsyncpa [#allocation5], 0
    %s9 = scalar_lea.sflag [#allocation5], 1
    %10 = vsyncpa %s9, 0
    loop: start=0, step=1, limit=18
    $region2: #{tpu_custom_call.1} parent=1 // loop_pre_header
      _
    $region3: #{tpu_custom_call.1} parent=1 // loop_header
      %s12 = sphi 0, %s16
      %p13 = scmp.ge.s32.totalorder %s12, 18
      %s19 = sphi 0, %s31
      %s20 = sphi 0, %s27
      %s21 = sphi 0, %s19
      %s22 = sphi 0, %s20
      %s23 = sphi 0, %s21
      %s24 = sphi 0, %s22
      %s34 = sphi 0, %s36
      %s37 = sphi 0, %s34
      %s38 = sphi 0, %s37
      %s54 = sphi 0, %s38
      %s60 = sphi 0, %s62
      %s63 = sphi 0, %s60
      %s64 = sphi 0, %s63
      %s80 = sphi 0, %s64
      %s86 = sphi 0, %s88
      %s89 = sphi 0, %s86
      %s90 = sphi 0, %s89
      %s106 = sphi 0, %s90
      %s112 = sphi 0, %s114
      %s115 = sphi 0, %s112
      %s116 = sphi 0, %s115
      %s132 = sphi 0, %s116
    $region4: #{tpu_custom_call.1} parent=1 // loop_header_branch
      %15 = sbr.rel (%p13) target = $region8
    $region5: #{tpu_custom_call.1} parent=1 // loop_body
      %s17 = ssub.s32 %s12, 1
      %s18 = ssub.s32 %s12, 2
      %s25 = sadd.s32 1, %s20
      %p26 = scmp.ge.s32.totalorder %s25, 4
      %s27 = scalar_select %p26, 0, %s25
      %s28 = sadd.s32 1, %s19
      %s29 = scalar_select %p26, %s28, %s19
      %p30 = scmp.ge.s32.totalorder %s29, 4
      %s31 = scalar_select %p30, 0, %s29
      %s32 = ssub.s32 %s19, %s31
      %p33 = scmp.eq.s32.totalorder %s32, 0
      %s35 = sadd.s32 %s34, 1
      %s36 = scalar_select %p33, %s34, %s35
      %p39 = pneg %p33
      %p40 = scmp.eq.s32.totalorder %s12, 15
      %p41 = por %p39, %p40
      %p42 = scmp.ne.s32.totalorder %s34, %s37
      %p43 = scmp.eq.s32.totalorder %s12, 0
      %p44 = por %p42, %p43
      %p45 = scmp.ne.s32.totalorder %s34, %s37
      %p46 = scmp.eq.s32.totalorder %s17, 15
      %p47 = por %p45, %p46
      %p48 = scmp.ne.s32.totalorder %s37, %s38
      %p49 = scmp.eq.s32.totalorder %s17, 0
      %p50 = por %p48, %p49
      %p51 = scmp.ne.s32.totalorder %s37, %s38
      %p52 = scmp.eq.s32.totalorder %s18, 15
      %p53 = por %p51, %p52
      %p55 = scmp.ne.s32.totalorder %s38, %s54
      %p56 = scmp.eq.s32.totalorder %s18, 0
      %p57 = por %p55, %p56
      %s58 = ssub.s32 %s20, %s27
      %p59 = scmp.eq.s32.totalorder %s58, 0
      %s61 = sadd.s32 %s60, 1
      %s62 = scalar_select %p59, %s60, %s61
      %p65 = pneg %p59
      %p66 = scmp.eq.s32.totalorder %s12, 15
      %p67 = por %p65, %p66
      %p68 = scmp.ne.s32.totalorder %s60, %s63
      %p69 = scmp.eq.s32.totalorder %s12, 0
      %p70 = por %p68, %p69
      %p71 = scmp.ne.s32.totalorder %s60, %s63
      %p72 = scmp.eq.s32.totalorder %s17, 15
      %p73 = por %p71, %p72
      %p74 = scmp.ne.s32.totalorder %s63, %s64
      %p75 = scmp.eq.s32.totalorder %s17, 0
      %p76 = por %p74, %p75
      %p77 = scmp.ne.s32.totalorder %s63, %s64
      %p78 = scmp.eq.s32.totalorder %s18, 15
      %p79 = por %p77, %p78
      %p81 = scmp.ne.s32.totalorder %s64, %s80
      %p82 = scmp.eq.s32.totalorder %s18, 0
      %p83 = por %p81, %p82
      %s84 = ssub.s32 %s19, %s31
      %p85 = scmp.eq.s32.totalorder %s84, 0
      %s87 = sadd.s32 %s86, 1
      %s88 = scalar_select %p85, %s86, %s87
      %p91 = pneg %p85
      %p92 = scmp.eq.s32.totalorder %s12, 15
      %p93 = por %p91, %p92
      %p94 = scmp.ne.s32.totalorder %s86, %s89
      %p95 = scmp.eq.s32.totalorder %s12, 0
      %p96 = por %p94, %p95
      %p97 = scmp.ne.s32.totalorder %s86, %s89
      %p98 = scmp.eq.s32.totalorder %s17, 15
      %p99 = por %p97, %p98
      %p100 = scmp.ne.s32.totalorder %s89, %s90
      %p101 = scmp.eq.s32.totalorder %s17, 0
      %p102 = por %p100, %p101
      %p103 = scmp.ne.s32.totalorder %s89, %s90
      %p104 = scmp.eq.s32.totalorder %s18, 15
      %p105 = por %p103, %p104
      %p107 = scmp.ne.s32.totalorder %s90, %s106
      %p108 = scmp.eq.s32.totalorder %s18, 0
      %p109 = por %p107, %p108
      %s110 = ssub.s32 %s19, %s31
      %p111 = scmp.eq.s32.totalorder %s110, 0
      %s113 = sadd.s32 %s112, 1
      %s114 = scalar_select %p111, %s112, %s113
      %p117 = pneg %p111
      %p118 = scmp.eq.s32.totalorder %s12, 15
      %p119 = por %p117, %p118
      %p120 = scmp.ne.s32.totalorder %s112, %s115
      %p121 = scmp.eq.s32.totalorder %s12, 0
      %p122 = por %p120, %p121
      %p123 = scmp.ne.s32.totalorder %s112, %s115
      %p124 = scmp.eq.s32.totalorder %s17, 15
      %p125 = por %p123, %p124
      %p126 = scmp.ne.s32.totalorder %s115, %s116
      %p127 = scmp.eq.s32.totalorder %s17, 0
      %p128 = por %p126, %p127
      %p129 = scmp.ne.s32.totalorder %s115, %s116
      %p130 = scmp.eq.s32.totalorder %s18, 15
      %p131 = por %p129, %p130
      %p133 = scmp.ne.s32.totalorder %s116, %s132
      %p134 = scmp.eq.s32.totalorder %s18, 0
      %p135 = por %p133, %p134
      %p136 = scmp.le.s32.totalorder 1, %s12
      %p137 = scmp.lt.s32.totalorder %s12, 17
      %p138 = pnand %p136, %p137
      %p139 = pneg %p138
      // Predicated region
      $region9: #{tpu_custom_call.1} parent=5 // pred_check
        _
      $region10: #{tpu_custom_call.1} parent=5 // pred_check_branch
        %141 = sbr.rel (%p138) target = $region12
      $region11: #{tpu_custom_call.1} parent=5 // pred_region
        %s142 = ssub.s32 %s12, 1
      $region12: #{tpu_custom_call.1} parent=5 // pred_fallthru
        _
      %p143 = scmp.lt.s32.totalorder %s12, 16
      // Predicated region
      $region13: #{tpu_custom_call.1} parent=5 // pred_check
        %p144 = pneg %p143
      $region14: #{tpu_custom_call.1} parent=5 // pred_check_branch
        %146 = sbr.rel (%p144) target = $region16
      $region15: #{tpu_custom_call.1} parent=5 // pred_region
        // Predicated region
        $region17: #{tpu_custom_call.1} parent=15 // pred_check
          %p147 = pneg %p44
        $region18: #{tpu_custom_call.1} parent=15 // pred_check_branch
          %149 = sbr.rel (%p147) target = $region20
        $region19: #{tpu_custom_call.1} parent=15 // pred_region
          %p150 = scmp.lt.s32.totalorder %s19, 3
          %s151 = scalar_select %p150, %s19, 3
          %s152 = smul.addr %s151, 8
          %s153 = scalar_lea.vmem %s0, %s152
        $region20: #{tpu_custom_call.1} parent=15 // pred_fallthru
          _
        // Predicated region
        $region21: #{tpu_custom_call.1} parent=15 // pred_check
          %p154 = pneg %p70
        $region22: #{tpu_custom_call.1} parent=15 // pred_check_branch
          %156 = sbr.rel (%p154) target = $region24
        $region23: #{tpu_custom_call.1} parent=15 // pred_region
          %s157 = sand.u32 %s60, 1
          %s158 = scalar_lea.sflag [#allocation5], %s157
          %s159 = sand.u32 %s60, 1
          %s160 = smul.addr %s159, 8
          %s161 = scalar_lea.vmem [#allocation4], %s160
          %s163 = ssub.s32 128, 128
          %164 = vsyncadd %s158, %s163
          %s165 = smul.addr %s20, 128
          %s166 = scalar_lea.hbm %s1, %s165
          %s168 = sshll.u32 %s161, 4
          %s169 = int_to_ptr.vmem [resolvable:$true] %s168
          %171 = dma.hbm_to_vmem [thread:$0]  %s166, 128, %s169, %s158
        $region24: #{tpu_custom_call.1} parent=15 // pred_fallthru
          _
        // Predicated region
        $region25: #{tpu_custom_call.1} parent=15 // pred_check
          %p172 = pneg %p96
        $region26: #{tpu_custom_call.1} parent=15 // pred_check_branch
          %174 = sbr.rel (%p172) target = $region28
        $region27: #{tpu_custom_call.1} parent=15 // pred_region
          %p175 = scmp.lt.s32.totalorder %s19, 3
          %s176 = scalar_select %p175, %s19, 3
          %s177 = smul.addr %s176, 8
          %s178 = scalar_lea.vmem %s2, %s177
        $region28: #{tpu_custom_call.1} parent=15 // pred_fallthru
          _
      $region16: #{tpu_custom_call.1} parent=5 // pred_fallthru
        _
      %p179 = scmp.le.s32.totalorder 1, %s12
      %p180 = scmp.lt.s32.totalorder %s12, 17
      %p181 = pnand %p179, %p180
      %p182 = pneg %p181
      // Predicated region
      $region29: #{tpu_custom_call.1} parent=5 // pred_check
        _
      $region30: #{tpu_custom_call.1} parent=5 // pred_check_branch
        %184 = sbr.rel (%p181) target = $region32
      $region31: #{tpu_custom_call.1} parent=5 // pred_region
        %s185 = ssub.s32 %s12, 1
        %s186 = sand.u32 %s63, 1
        %s187 = scalar_lea.sflag [#allocation5], %s186
        %s188 = sand.u32 %s63, 1
        %s189 = smul.addr %s188, 8
        %s190 = scalar_lea.vmem [#allocation4], %s189
        // Predicated region
        $region33: #{tpu_custom_call.1} parent=31 // pred_check
          %p191 = pneg %p76
        $region34: #{tpu_custom_call.1} parent=31 // pred_check_branch
          %193 = sbr.rel (%p191) target = $region36
        $region35: #{tpu_custom_call.1} parent=31 // pred_region
          %194 = dma.done %s187, 128
        $region36: #{tpu_custom_call.1} parent=31 // pred_fallthru
          _
        %p195 = scmp.lt.s32.totalorder %s21, 3
        %s196 = scalar_select %p195, %s21, 3
        %s197 = smul.addr %s196, 8
        %s198 = scalar_lea.vmem %s0, %s197
        %p199 = pneg %p50
        %p200 = pneg %p47
        %s201 = sand.u32 %s63, 1
        %s202 = scalar_lea.sflag [#allocation5], %s201
        %s203 = sand.u32 %s63, 1
        %s204 = smul.addr %s203, 8
        %s205 = scalar_lea.vmem [#allocation4], %s204
        %p206 = pneg %p76
        %p207 = pneg %p73
        %p208 = scmp.lt.s32.totalorder %s21, 3
        %s209 = scalar_select %p208, %s21, 3
        %s210 = smul.addr %s209, 8
        %s211 = scalar_lea.vmem %s2, %s210
        %p212 = pneg %p102
        %p213 = pneg %p99
        %p214 = pneg %p128
        %p215 = pneg %p125
        %p216 = scmp.lt.s32.totalorder %s21, 3
        %s217 = scalar_select %p216, %s21, 3
        %s218 = smul.addr %s217, 8
        %s219 = scalar_lea.vmem %s3, %s218
        %p220 = scmp.lt.s32.totalorder %s21, 3
        %s221 = scalar_select %p220, %s21, 3
        %s222 = smul.addr %s221, 8
        %s223 = scalar_lea.vmem %s0, %s222
        %p224 = scmp.lt.s32.totalorder %s21, 3
        %s225 = scalar_select %p224, %s21, 3
        %s226 = smul.addr %s225, 8
        %s227 = scalar_lea.vmem %s2, %s226
        %p228 = scmp.lt.s32.totalorder %s21, 3
        %s229 = scalar_select %p228, %s21, 3
        %s230 = smul.addr %s229, 8
        %s231 = scalar_lea.vmem %s3, %s230
        %p232 = scmp.eq.s32.totalorder %s22, 0
        // Predicated region
        $region37: #{tpu_custom_call.1} parent=31 // pred_check
          %p233 = pneg %p232
        $region38: #{tpu_custom_call.1} parent=31 // pred_check_branch
          %235 = sbr.rel (%p233) target = $region40
        $region39: #{tpu_custom_call.1} parent=31 // pred_region
          %vm236 = vcmask 7168
          %237 = vst.msk [vmem:[#allocation2] sm:$0xff] %vm236, -inf
          %238 = vst.msk [vmem:[#allocation3] sm:$0xff] %vm236, 0.0
        $region40: #{tpu_custom_call.1} parent=31 // pred_fallthru
          _
        %v239 = vld [vmem:[%s223] sm:$0xff]
        %v240 = vld [vmem:[%s190] sm:$0xff]
        %vm241 = vcmask 261120
        %v243 = vsel %vm241, %v239, 0
        %v246 = vsel %vm241, %v240, 0
        %248 = vmatprep.subr.mxu0 0.0
        %249 = vmatpush1.xpose.msra.mxu0 %v246
        %250 = vmatprep.subr.mxu0 0.0
        %251 = vmatpush1.xpose.msra.mxu0 0.0
        %252 = vmatprep.subr.mxu0 0.0
        %253 = vmatpush1.xpose.msra.mxu0 0.0
        %254 = vmatprep.subr.mxu0 0.0
        %255 = vmatpush1.xpose.msra.mxu0 0.0
        %256 = vmatprep.subr.mxu0 0.0
        %257 = vmatpush1.xpose.msra.mxu0 0.0
        %258 = vmatprep.subr.mxu0 0.0
        %259 = vmatpush1.xpose.msra.mxu0 0.0
        %260 = vmatprep.subr.mxu0 0.0
        %261 = vmatpush1.xpose.msra.mxu0 0.0
        %262 = vmatprep.subr.mxu0 0.0
        %263 = vmatpush1.xpose.msra.mxu0 0.0
        %264 = vmatprep.subr.mxu0 0.0
        %265 = vmatpush1.xpose.msra.mxu0 0.0
        %266 = vmatprep.subr.mxu0 0.0
        %267 = vmatpush1.xpose.msra.mxu0 0.0
        %268 = vmatprep.subr.mxu0 0.0
        %269 = vmatpush1.xpose.msra.mxu0 0.0
        %270 = vmatprep.subr.mxu0 0.0
        %271 = vmatpush1.xpose.msra.mxu0 0.0
        %272 = vmatprep.subr.mxu0 0.0
        %273 = vmatpush1.xpose.msra.mxu0 0.0
        %274 = vmatprep.subr.mxu0 0.0
        %275 = vmatpush1.xpose.msra.mxu0 0.0
        %276 = vmatprep.subr.mxu0 0.0
        %277 = vmatpush1.xpose.msra.mxu0 0.0
        %278 = vmatprep.subr.mxu0 0.0
        %279 = vmatpush1.xpose.msra.mxu0 0.0
        %280 = vmatprep.subr.mxu0 0.0
        %281 = vmatpush1.xpose.msra.mxu0 0.0
        %282 = vmatprep.subr.mxu0 0.0
        %283 = vmatpush1.xpose.msra.mxu0 0.0
        %284 = vmatprep.subr.mxu0 0.0
        %285 = vmatpush1.xpose.msra.mxu0 0.0
        %286 = vmatprep.subr.mxu0 0.0
        %287 = vmatpush1.xpose.msra.mxu0 0.0
        %288 = vmatprep.subr.mxu0 0.0
        %289 = vmatpush1.xpose.msra.mxu0 0.0
        %290 = vmatprep.subr.mxu0 0.0
        %291 = vmatpush1.xpose.msra.mxu0 0.0
        %292 = vmatprep.subr.mxu0 0.0
        %293 = vmatpush1.xpose.msra.mxu0 0.0
        %294 = vmatprep.subr.mxu0 0.0
        %295 = vmatpush1.xpose.msra.mxu0 0.0
        %296 = vmatprep.subr.mxu0 0.0
        %297 = vmatpush1.xpose.msra.mxu0 0.0
        %298 = vmatprep.subr.mxu0 0.0
        %299 = vmatpush1.xpose.msra.mxu0 0.0
        %300 = vmatprep.subr.mxu0 0.0
        %301 = vmatpush1.xpose.msra.mxu0 0.0
        %302 = vmatprep.subr.mxu0 0.0
        %303 = vmatpush1.xpose.msra.mxu0 0.0
        %304 = vmatprep.subr.mxu0 0.0
        %305 = vmatpush1.xpose.msra.mxu0 0.0
        %306 = vmatprep.subr.mxu0 0.0
        %307 = vmatpush1.xpose.msra.mxu0 0.0
        %308 = vmatprep.subr.mxu0 0.0
        %309 = vmatpush1.xpose.msra.mxu0 0.0
        %310 = vmatprep.subr.mxu0 0.0
        %311 = vmatpush1.xpose.msra.mxu0 0.0
        %312 = vmatprep.mubr.f32.mxu0 0.0
        %313 = vmatmul.mubr.f32.gmra.mrb[0].mxu0 %v243
        %v314 = vpop.f32.mrb[0].mxu0
        %v315 = vadd.f32 0.0, %v314
        %v316 = vpop.f32.mrb[0].mxu0
        %317 = vdwg.mxu0
        %s318 = smul.u32 %s21, 8
        %v319 = vlaneseq
        %v320 = vshrl.u32 %v319, 7
        %v321 = vstv %s318
        %v322 = vadd.s32 %v321, %v320
        %s323 = smul.u32 %s22, 8
        %v324 = vlaneseq
        %v325 = vand.u32 %v324, 127
        %v326 = vstv %s323
        %v327 = vadd.s32 %v326, %v325
        %vm328 = vcmp.eq.s32.totalorder %v322, %v327
        %v329 = vsel %vm328, -3.4028235e+38, %v315
        %v330 = vld [vmem:[#allocation2] sm:$0xff]
        %vm331 = vcmask 64512
        %v332 = vsel %vm331, %v329, -inf
        %333 = vmax.xlane.f32.xlu0 %v332
        %v334 = vpop.xlane.xlu0 %333
        %v335 = vmax.f32 %v330, %v334
        %v336 = vsub.f32 %v330, %v335
        %v337 = vmul.f32 %v336, 1.442695
        %v338 = vpow.pop %v337
        %v339 = vld [vmem:[#allocation3] sm:$0xff]
        %v340 = vmul.f32 %v338, %v339
        %342 = vset.pattern.permute.xlu0 0
        %343 = vperm.xlu0 %342, %v335
        %v344 = vpop.permute.xlu0 %343
        %v346 = vsub.f32 %v329, %v344
        %v347 = vmul.f32 %v346, 1.442695
        %v348 = vpow.pop %v347
        %v349 = vsel %vm331, %v348, 0.0
        %350 = vadd.xlane.f32.xlu0 %v349
        %v351 = vpop.xlane.xlu0 %350
        %v352 = vadd.f32 %v340, %v351
        %vm353 = vcmask 7168
        %354 = vst.msk [vmem:[#allocation3] sm:$0xff] %vm353, %v352
        %355 = vst.msk [vmem:[#allocation2] sm:$0xff] %vm353, %v335
        %p356 = scmp.eq.s32.totalorder %s22, 3
        // Predicated region
        $region41: #{tpu_custom_call.1} parent=31 // pred_check
          %p357 = pneg %p356
        $region42: #{tpu_custom_call.1} parent=31 // pred_check_branch
          %359 = sbr.rel (%p357) target = $region44
        $region43: #{tpu_custom_call.1} parent=31 // pred_region
          %v360 = vld [vmem:[#allocation2] sm:$0xff]
          %v361 = vld [vmem:[#allocation3] sm:$0xff]
          %v362 = vlog2.pop %v361
          %v363 = vmul.f32 %v362, 0.6931472
          %v364 = vadd.f32 %v360, %v363
          %v365 = vld [vmem:[%s227] sm:$0xff]
          %v366 = vsub.f32 %v364, %v365
          %367 = vst.msk [vmem:[%s231] sm:$0xff] %vm353, %v366
        $region44: #{tpu_custom_call.1} parent=31 // pred_fallthru
          _
        %p368 = scmp.lt.s32.totalorder %s21, 3
        %s369 = scalar_select %p368, %s21, 3
        %s370 = smul.addr %s369, 8
        %s371 = scalar_lea.vmem %s3, %s370
        // Predicated region
        $region45: #{tpu_custom_call.1} parent=31 // pred_check
          %p372 = pneg %p125
        $region46: #{tpu_custom_call.1} parent=31 // pred_check_branch
          %374 = sbr.rel (%p372) target = $region48
        $region47: #{tpu_custom_call.1} parent=31 // pred_region
          _
        $region48: #{tpu_custom_call.1} parent=31 // pred_fallthru
          _
      $region32: #{tpu_custom_call.1} parent=5 // pred_fallthru
        _
      %p375 = scmp.le.s32.totalorder 2, %s12
      // Predicated region
      $region49: #{tpu_custom_call.1} parent=5 // pred_check
        %p376 = pneg %p375
      $region50: #{tpu_custom_call.1} parent=5 // pred_check_branch
        %378 = sbr.rel (%p376) target = $region52
      $region51: #{tpu_custom_call.1} parent=5 // pred_region
        %s379 = ssub.s32 %s12, 2
        // Predicated region
        $region53: #{tpu_custom_call.1} parent=51 // pred_check
          %p380 = pneg %p131
        $region54: #{tpu_custom_call.1} parent=51 // pred_check_branch
          %382 = sbr.rel (%p380) target = $region56
        $region55: #{tpu_custom_call.1} parent=51 // pred_region
          %p383 = scmp.lt.s32.totalorder %s23, 3
          %s384 = scalar_select %p383, %s23, 3
          %s385 = smul.addr %s384, 8
          %s386 = scalar_lea.vmem %s3, %s385
        $region56: #{tpu_custom_call.1} parent=51 // pred_fallthru
          _
      $region52: #{tpu_custom_call.1} parent=5 // pred_fallthru
        _
    $region6: #{tpu_custom_call.1} parent=1 // loop_footer
      %s16 = sadd.s32 1, %s12
    $region7: #{tpu_custom_call.1} parent=1 // loop_footer_branch
      %11 = sbr.rel target = $region3
    $region8: #{tpu_custom_call.1} parent=1 // loop_exit
      _
    %387 = vsyncpa [#allocation5], 1
    %s388 = scalar_lea.sflag [#allocation5], 1
    %389 = vsyncpa %s388, 1

</llo_original>
